<compile_context>
chip_gen: v7x
topology: tpu7x:2x2x1
jax: 0.10.0
libtpu: 0.0.40
codegen_flags: <defaults>
</compile_context>

<pallas_src>
import math
import functools

import jax
import jax.numpy as jnp
from jax.experimental import pallas as pl
from jax.experimental.pallas import tpu as pltpu


def _pe_add_kernel(x_ref, pos_ref, o_ref):
    # x_ref: (TILE_S, B, E), pos_ref: (TILE_S, 1, E) -> broadcast over batch.
    o_ref[...] = x_ref[...] + pos_ref[...]


def _pe_add_dropout_kernel(x_ref, pos_ref, bits_ref, o_ref, *, threshold, scale):
    # nn.Dropout semantics: zero with prob p, scale kept values by 1/(1-p).
    # Integer-threshold comparison on raw uint32 bits (no float convert).
    y = x_ref[...] + pos_ref[...]
    keep = bits_ref[...] >= jnp.uint32(threshold)
    o_ref[...] = jnp.where(keep, y * jnp.asarray(scale, y.dtype), jnp.zeros_like(y))


def make_pos_embedding(embedding_size: int, max_size: int) -> jnp.ndarray:
    """Deterministic buffer construction, identical math to the torch __init__."""
    den = jnp.exp(
        -jnp.arange(0, embedding_size, 2, dtype=jnp.float32)
        * math.log(10000.0)
        / embedding_size
    )
    pos = jnp.arange(0, max_size, dtype=jnp.float32).reshape(max_size, 1)
    pe = jnp.zeros((max_size, embedding_size), dtype=jnp.float32)
    pe = pe.at[:, 0::2].set(jnp.sin(pos * den))
    pe = pe.at[:, 1::2].set(jnp.cos(pos * den))
    return pe[:, None, :]  # (max_size, 1, embedding_size)


def positional_encoding_forward(
    token_embedding: jnp.ndarray,   # (S, B, E)
    pos_embedding: jnp.ndarray,     # (max_size, 1, E)
    *,
    dropout_p: float = 0.1,
    training: bool = False,
    rng_key=None,
    block_rows: int | None = None,
) -> jnp.ndarray:
    S, B, E = token_embedding.shape
    dtype = token_embedding.dtype
    # Cast pos once in the wrapper so in-kernel math stays in the input dtype.
    pos_slice = pos_embedding[:S].astype(dtype)  # (S, 1, E)

    # Tile over the sequence axis. Aim for ~1 MiB per x-block; with x/out
    # (+ bits in training) double-buffered plus the tiny pos block this stays
    # well under v7x's 64 MiB VMEM while being big enough to hit HBM roofline.
    bytes_per_row = B * E * jnp.dtype(dtype).itemsize
    if block_rows is None:
        block_rows = max(1, (1 << 20) // max(1, bytes_per_row))
    tile_s = min(S, block_rows)
    grid = (pl.cdiv(S, tile_s),)

    x_spec = pl.BlockSpec((tile_s, B, E), lambda i: (i, 0, 0))
    pos_spec = pl.BlockSpec((tile_s, 1, E), lambda i: (i, 0, 0))
    out_spec = pl.BlockSpec((tile_s, B, E), lambda i: (i, 0, 0))

    compiler_params = pltpu.CompilerParams(dimension_semantics=("parallel",))

    if training and dropout_p > 0.0:
        if dropout_p >= 1.0:
            return jnp.zeros_like(token_embedding)
        if rng_key is None:
            rng_key = jax.random.PRNGKey(0)
        # TODO(synk): on a real TPU the bits could be drawn in-kernel with
        # pltpu.prng_seed/prng_random_bits (per-block seeded via program_id),
        # saving one HBM input stream; those primitives have no lowering in the
        # generic Pallas interpreter, so bits are generated outside the kernel
        # for portability.
        bits = jax.random.bits(rng_key, (S, B, E), dtype=jnp.uint32)
        threshold = min(int(round(dropout_p * 2.0 ** 32)), (1 << 32) - 1)
        scale = 1.0 / (1.0 - dropout_p)
        kernel = functools.partial(
            _pe_add_dropout_kernel, threshold=threshold, scale=scale
        )
        bits_spec = pl.BlockSpec((tile_s, B, E), lambda i: (i, 0, 0))
        return pl.pallas_call(
            kernel,
            out_shape=jax.ShapeDtypeStruct((S, B, E), dtype),
            grid=grid,
            in_specs=[x_spec, pos_spec, bits_spec],
            out_specs=out_spec,
            compiler_params=compiler_params,
        )(token_embedding, pos_slice, bits)

    # Eval path: dropout is identity -> pure elementwise add, minimal plumbing.
    return pl.pallas_call(
        _pe_add_kernel,
        out_shape=jax.ShapeDtypeStruct((S, B, E), dtype),
        grid=grid,
        in_specs=[x_spec, pos_spec],
        out_specs=out_spec,
        compiler_params=compiler_params,
    )(token_embedding, pos_slice)


if __name__ == "__main__":
    # Module config (synthetic, deterministic)
    embedding_size = 32
    dropout_p = 0.1
    max_size = 16

    # Input: seq-first (S, B, E)
    S, B = 8, 2
    key = jax.random.PRNGKey(0)
    k_x, k_drop = jax.random.split(key)
    token_embedding = jax.random.normal(k_x, (S, B, embedding_size), dtype=jnp.float32)

    pos_embedding = make_pos_embedding(embedding_size, max_size)

    # Eval-mode forward (dropout is identity), matching module semantics.
    out = positional_encoding_forward(
        token_embedding, pos_embedding, dropout_p=dropout_p, training=False
    )
    out = jax.block_until_ready(out)

    ref = token_embedding + pos_embedding[:S]
    assert out.shape == (S, B, embedding_size)
    assert jnp.allclose(out, ref, atol=1e-6), "mismatch vs reference (eval)"

    # Training (dropout) path: each element is either 0 or (x+pos)/(1-p).
    out_train = positional_encoding_forward(
        token_embedding,
        pos_embedding,
        dropout_p=dropout_p,
        training=True,
        rng_key=k_drop,
    )
    out_train = jax.block_until_ready(out_train)
    scaled_ref = ref / (1.0 - dropout_p)
    ok = jnp.isclose(out_train, scaled_ref, atol=1e-5) | (out_train == 0.0)
    assert bool(jnp.all(ok)), "mismatch vs reference (train)"

    print("KERNEL_OK")
</pallas_src>

<mosaic_0001>
module attributes {stable_mosaic.version = 11 : i64} {
  func.func @_pe_add_kernel(%arg0: i32, %arg1: memref<8x2x32xf32, #tpu.memory_space<vmem>>, %arg2: memref<8x1x32xf32, #tpu.memory_space<vmem>>, %arg3: memref<8x2x32xf32, #tpu.memory_space<vmem>>) attributes {dimension_semantics = [#tpu.dimension_semantics<parallel>], iteration_bounds = array<i64: 1>, scalar_prefetch = 0 : i64, scratch_operands = 0 : i64, tpu.core_type = #tpu.core_type<tc>, window_params = [{transform_indices = @transform_0, window_bounds = array<i64: 8, 2, 32>}, {transform_indices = @transform_1, window_bounds = array<i64: 8, 1, 32>}, {transform_indices = @transform_2, window_bounds = array<i64: 8, 2, 32>}]} {
    %c0 = arith.constant 0 : index
    %c0_0 = arith.constant 0 : index
    %c0_1 = arith.constant 0 : index
    %0 = vector.load %arg1[%c0, %c0_0, %c0_1] : memref<8x2x32xf32, #tpu.memory_space<vmem>>, vector<8x2x32xf32>
    %c0_2 = arith.constant 0 : index
    %c0_3 = arith.constant 0 : index
    %c0_4 = arith.constant 0 : index
    %1 = vector.load %arg2[%c0_2, %c0_3, %c0_4] : memref<8x1x32xf32, #tpu.memory_space<vmem>>, vector<8x1x32xf32>
    %2 = vector.broadcast %1 : vector<8x1x32xf32> to vector<8x2x32xf32>
    %3 = arith.addf %0, %2 : vector<8x2x32xf32>
    %c0_5 = arith.constant 0 : index
    %c0_6 = arith.constant 0 : index
    %c0_7 = arith.constant 0 : index
    %4 = vector.load %arg3[%c0_5, %c0_6, %c0_7] : memref<8x2x32xf32, #tpu.memory_space<vmem>>, vector<8x2x32xf32>
    tpu.vector_store %arg3[%c0_5, %c0_6, %c0_7], %3 {strides = array<i32>} : memref<8x2x32xf32, #tpu.memory_space<vmem>>, vector<8x2x32xf32>,
    return
  }
  func.func @transform_0(%arg0: i32) -> (i32, i32, i32) {
    %c0_i32 = arith.constant 0 : i32
    %c0_i32_0 = arith.constant 0 : i32
    %c0_i32_1 = arith.constant 0 : i32
    return %arg0, %c0_i32, %c0_i32_0 : i32, i32, i32
  }
  func.func @transform_1(%arg0: i32) -> (i32, i32, i32) {
    %c0_i32 = arith.constant 0 : i32
    %c0_i32_0 = arith.constant 0 : i32
    %c0_i32_1 = arith.constant 0 : i32
    return %arg0, %c0_i32, %c0_i32_0 : i32, i32, i32
  }
  func.func @transform_2(%arg0: i32) -> (i32, i32, i32) {
    %c0_i32 = arith.constant 0 : i32
    %c0_i32_0 = arith.constant 0 : i32
    %c0_i32_1 = arith.constant 0 : i32
    return %arg0, %c0_i32, %c0_i32_0 : i32, i32, i32
  }
}

</mosaic_0001>

<llo_original>
// kernel: tpu_custom_call.1
$region0: #{tpu_custom_call.1}
  #allocation0 [shape = 'u32[]', space=smem, size = 0x4, offset = 0x4, fixed_abs, tag = 'smem constant byte address 0x4 - core index']
  #allocation1 [shape = 'u32[144,128]{1,0:T(1,128)}', space=vmem, size = 0x12000, scoped, tag = 'internal scratch']
  %s0 = inlined_call_operand.hbm [shape: f32[8,2,32], index: 0, kind: input, shape index: {}]
  %s1 = inlined_call_operand.hbm [shape: f32[8,1,32], index: 1, kind: input, shape index: {}]
  %s2 = inlined_call_operand.hbm [shape: f32[8,2,32], index: 2, kind: output, shape index: {}]
  %s3 = sld [smem:[#allocation0]]
  $region26: #{tpu_custom_call.1} parent=0
    _
  %s5 = ssub.s32 1, %s3
  %s6 = scalar_select 0, %s5, %s3
  $region1: #{tpu_custom_call.1} parent=0
    #allocation2 [shape = 'u8[8192]{0}', space=vmem, size = 0x2000, scoped, tag = 'input window, operand 0, single buffered']
    #allocation3 [shape = 's32[1]{0}', space=sflag, size = 0x4, scoped, tag = 'scoped memory for tpu_custom_call.1']
    #allocation4 [shape = 's32[1]{0}', space=sflag, size = 0x4, scoped, tag = 'scoped memory for tpu_custom_call.1']
    #allocation5 [shape = 'u8[4096]{0}', space=vmem, size = 0x1000, scoped, tag = 'input window, operand 1, single buffered']
    #allocation6 [shape = 's32[1]{0}', space=sflag, size = 0x4, scoped, tag = 'scoped memory for tpu_custom_call.1']
    #allocation7 [shape = 'u8[8192]{0}', space=vmem, size = 0x2000, scoped, tag = 'output window, operand 0, single buffered']
    %7 = vsyncpa [#allocation3], 0
    %8 = vsyncpa [#allocation6], 0
    %9 = vsyncpa [#allocation4], 0
    // Predicated region
    $region2: #{tpu_custom_call.1} parent=1 // pred_check
      _
    $region3: #{tpu_custom_call.1} parent=1 // pred_check_branch
      %11 = sbr.rel (0) target = $region5
    $region4: #{tpu_custom_call.1} parent=1 // pred_region
      %s13 = ssub.s32 256, 256
      %14 = vsyncadd [#allocation3], %s13
      %s15 = sshll.u32 [#allocation2], 4
      %s16 = int_to_ptr.vmem [resolvable:$true] %s15
      %21 = dma.hbm_to_vmem [thread:$0]  %s0, 256, %s16, [#allocation3], 32, 32, 2
    $region5: #{tpu_custom_call.1} parent=1 // pred_fallthru
      _
    // Predicated region
    $region6: #{tpu_custom_call.1} parent=1 // pred_check
      _
    $region7: #{tpu_custom_call.1} parent=1 // pred_check_branch
      %23 = sbr.rel (0) target = $region9
    $region8: #{tpu_custom_call.1} parent=1 // pred_region
      %s25 = ssub.s32 128, 128
      %26 = vsyncadd [#allocation6], %s25
      %s27 = sshll.u32 [#allocation5], 4
      %s28 = int_to_ptr.vmem [resolvable:$true] %s27
      %33 = dma.hbm_to_vmem [thread:$0]  %s1, 128, %s28, [#allocation6], 16, 16, 1
    $region9: #{tpu_custom_call.1} parent=1 // pred_fallthru
      _
    // Predicated region
    $region10: #{tpu_custom_call.1} parent=1 // pred_check
      _
    $region11: #{tpu_custom_call.1} parent=1 // pred_check_branch
      %35 = sbr.rel (0) target = $region13
    $region12: #{tpu_custom_call.1} parent=1 // pred_region
      %36 = dma.done [#allocation3], 256
    $region13: #{tpu_custom_call.1} parent=1 // pred_fallthru
      _
    // Predicated region
    $region14: #{tpu_custom_call.1} parent=1 // pred_check
      _
    $region15: #{tpu_custom_call.1} parent=1 // pred_check_branch
      %38 = sbr.rel (0) target = $region17
    $region16: #{tpu_custom_call.1} parent=1 // pred_region
      %39 = dma.done [#allocation6], 128
    $region17: #{tpu_custom_call.1} parent=1 // pred_fallthru
      _
    %v40 = vld [vmem:[#allocation2] sm:$0x3]
    %v41 = vld [vmem:[#allocation2 + $0x2] sm:$0x3]
    %v42 = vld [vmem:[#allocation2 + $0x4] sm:$0x3]
    %v43 = vld [vmem:[#allocation2 + $0x6] sm:$0x3]
    %v44 = vld [vmem:[#allocation2 + $0x8] sm:$0x3]
    %v45 = vld [vmem:[#allocation2 + $0xa] sm:$0x3]
    %v46 = vld [vmem:[#allocation2 + $0xc] sm:$0x3]
    %v47 = vld [vmem:[#allocation2 + $0xe] sm:$0x3]
    %v48 = vld [vmem:[#allocation5] sm:$0x1]
    %v49 = vld [vmem:[#allocation5 + $0x1] sm:$0x1]
    %v50 = vld [vmem:[#allocation5 + $0x2] sm:$0x1]
    %v51 = vld [vmem:[#allocation5 + $0x3] sm:$0x1]
    %v52 = vld [vmem:[#allocation5 + $0x4] sm:$0x1]
    %v53 = vld [vmem:[#allocation5 + $0x5] sm:$0x1]
    %v54 = vld [vmem:[#allocation5 + $0x6] sm:$0x1]
    %v55 = vld [vmem:[#allocation5 + $0x7] sm:$0x1]
    %v64 = vlaneseq
    %v65 = vshrl.u32 %v64, 7
    %v66 = vsub.s32 0, %v65
    %v67 = vrot.slane %v48, %v66
    %v68 = vlaneseq
    %v69 = vshrl.u32 %v68, 7
    %v70 = vsub.s32 0, %v69
    %v71 = vrot.slane %v49, %v70
    %v72 = vlaneseq
    %v73 = vshrl.u32 %v72, 7
    %v74 = vsub.s32 0, %v73
    %v75 = vrot.slane %v50, %v74
    %v76 = vlaneseq
    %v77 = vshrl.u32 %v76, 7
    %v78 = vsub.s32 0, %v77
    %v79 = vrot.slane %v51, %v78
    %v80 = vlaneseq
    %v81 = vshrl.u32 %v80, 7
    %v82 = vsub.s32 0, %v81
    %v83 = vrot.slane %v52, %v82
    %v84 = vlaneseq
    %v85 = vshrl.u32 %v84, 7
    %v86 = vsub.s32 0, %v85
    %v87 = vrot.slane %v53, %v86
    %v88 = vlaneseq
    %v89 = vshrl.u32 %v88, 7
    %v90 = vsub.s32 0, %v89
    %v91 = vrot.slane %v54, %v90
    %v92 = vlaneseq
    %v93 = vshrl.u32 %v92, 7
    %v94 = vsub.s32 0, %v93
    %v95 = vrot.slane %v55, %v94
    %v104 = vadd.f32 %v40, %v67
    %v105 = vadd.f32 %v41, %v71
    %v106 = vadd.f32 %v42, %v75
    %v107 = vadd.f32 %v43, %v79
    %v108 = vadd.f32 %v44, %v83
    %v109 = vadd.f32 %v45, %v87
    %v110 = vadd.f32 %v46, %v91
    %v111 = vadd.f32 %v47, %v95
    %vm112 = vcmask 254976
    %113 = vst.msk [vmem:[#allocation7] sm:$0x3] %vm112, %v104
    %114 = vst.msk [vmem:[#allocation7 + $0x2] sm:$0x3] %vm112, %v105
    %115 = vst.msk [vmem:[#allocation7 + $0x4] sm:$0x3] %vm112, %v106
    %116 = vst.msk [vmem:[#allocation7 + $0x6] sm:$0x3] %vm112, %v107
    %117 = vst.msk [vmem:[#allocation7 + $0x8] sm:$0x3] %vm112, %v108
    %118 = vst.msk [vmem:[#allocation7 + $0xa] sm:$0x3] %vm112, %v109
    %119 = vst.msk [vmem:[#allocation7 + $0xc] sm:$0x3] %vm112, %v110
    %120 = vst.msk [vmem:[#allocation7 + $0xe] sm:$0x3] %vm112, %v111
    // Predicated region
    $region18: #{tpu_custom_call.1} parent=1 // pred_check
      _
    $region19: #{tpu_custom_call.1} parent=1 // pred_check_branch
      %122 = sbr.rel (0) target = $region21
    $region20: #{tpu_custom_call.1} parent=1 // pred_region
      %s124 = ssub.s32 256, 256
      %125 = vsyncadd [#allocation4], %s124
      %s126 = sshll.u32 [#allocation7], 4
      %s127 = int_to_ptr.vmem [resolvable:$true] %s126
      %132 = dma.vmem_to_hbm [thread:$0]  %s127, 256, %s2, [#allocation4], 32, 32, 2
    $region21: #{tpu_custom_call.1} parent=1 // pred_fallthru
      _
    // Predicated region
    $region22: #{tpu_custom_call.1} parent=1 // pred_check
      _
    $region23: #{tpu_custom_call.1} parent=1 // pred_check_branch
      %134 = sbr.rel (0) target = $region25
    $region24: #{tpu_custom_call.1} parent=1 // pred_region
      %135 = dma.done [#allocation4], 256
    $region25: #{tpu_custom_call.1} parent=1 // pred_fallthru
      _
    %136 = vsyncpa [#allocation3], 1
    %137 = vsyncpa [#allocation6], 1
    %138 = vsyncpa [#allocation4], 1

</llo_original>
